<compile_context>
chip_gen: v6e
topology: v6e:2x2x1
jax: 0.10.0
libtpu: 0.0.40
codegen_flags: <defaults>
</compile_context>

<pallas_src>
import jax
import jax.numpy as jnp
from jax import lax
from jax.experimental import pallas as pl
from jax.experimental.pallas import tpu as pltpu  # noqa: F401  (TPU backend)

_LANES = 128
_MICRO_ROWS = 64          # rows 0..31 micro_dr, rows 32..63 micro_df
_MACRO_DR_ROW = 64
_MACRO_DF_ROW = 65
_SLAB_ROWS = 72           # padded to a multiple of 8 sublanes
_N_MICRO = 64 * 64        # elements per micro tensor
_N_MACRO = 3 * 3          # elements per macro tensor


def adversarial_own_loss_kernel(slab_ref, out_ref):
    x = slab_ref[...]                                              # (72, 128) f32

    rows = lax.broadcasted_iota(jnp.int32, x.shape, 0)             # (72, 128)
    # Rows carrying target==1 data (micro_dr, macro_dr) or 1.0 padding.
    ones_rows = (rows < 32) | (rows == _MACRO_DR_ROW) | (rows >= _MACRO_DF_ROW + 1)

    lg_real = jnp.maximum(jnp.log(x), -100.0)                      # target == 1 branch
    lg_fake = jnp.maximum(jnp.log(1.0 - x), -100.0)                # target == 0 branch
    lg = jnp.where(ones_rows, lg_real, lg_fake)                    # padding contributes 0

    # Single lane-reduction pass over the whole slab, then tiny sublane combines.
    row_sums = jnp.sum(lg, axis=-1, keepdims=True)                 # (72, 1)
    r = rows[:, 0:1]                                               # (72, 1) row index
    zero = jnp.zeros_like(row_sums)

    s_real_h = jnp.sum(jnp.where(r < 32, row_sums, zero), axis=0, keepdims=True)
    s_fake_h = jnp.sum(jnp.where((r >= 32) & (r < 64), row_sums, zero), axis=0, keepdims=True)
    s_real_l = jnp.sum(jnp.where(r == _MACRO_DR_ROW, row_sums, zero), axis=0, keepdims=True)
    s_fake_l = jnp.sum(jnp.where(r == _MACRO_DF_ROW, row_sums, zero), axis=0, keepdims=True)

    real_l_loss = -s_real_l / _N_MACRO                             # (1, 1) BCE means
    fake_l_loss = -s_fake_l / _N_MACRO
    real_h_loss = -s_real_h / _N_MICRO
    fake_h_loss = -s_fake_h / _N_MICRO

    d_loss = jnp.log(real_l_loss) + jnp.log(1.0 - fake_l_loss)
    d_loss1 = jnp.log(real_h_loss) + jnp.log(1.0 - fake_h_loss)
    result = d_loss * d_loss + d_loss1 * d_loss1                   # (1, 1)

    # Lane-dense output: unmasked vector store; wrapper slices [0, 0].
    out_ref[...] = jnp.broadcast_to(result, out_ref.shape)


def adversarial_own_loss(macro_dr, macro_df, micro_dr, micro_df):
    """Inputs are NCHW with N=C=1: macro_* (1,1,3,3), micro_* (1,1,64,64)."""
    f32 = jnp.float32

    # Lane-dense packing (all reshapes are row-major and free).
    udr = micro_dr.reshape(32, 128).astype(f32)
    udf = micro_df.reshape(32, 128).astype(f32)
    # Pad lanes with 1.0 on the target==1 row (log(1)=0) and 0.0 on the
    # target==0 row (log(1-0)=0) so they add nothing to the group sums.
    mdr_row = jnp.concatenate(
        [macro_dr.reshape(1, _N_MACRO).astype(f32),
         jnp.ones((1, _LANES - _N_MACRO), f32)], axis=1)
    mdf_row = jnp.concatenate(
        [macro_df.reshape(1, _N_MACRO).astype(f32),
         jnp.zeros((1, _LANES - _N_MACRO), f32)], axis=1)
    pad = jnp.ones((_SLAB_ROWS - _MICRO_ROWS - 2, _LANES), f32)
    slab = jnp.concatenate([udr, udf, mdr_row, mdf_row, pad], axis=0)   # (72, 128)

    ce = pl.CostEstimate(
        flops=6 * _SLAB_ROWS * _LANES,
        transcendentals=2 * _SLAB_ROWS * _LANES + 8,
        bytes_accessed=_SLAB_ROWS * _LANES * 4 + _LANES * 4,
    )

    out = pl.pallas_call(
        adversarial_own_loss_kernel,
        out_shape=jax.ShapeDtypeStruct((1, _LANES), jnp.float32),
        in_specs=[pl.BlockSpec((_SLAB_ROWS, _LANES), lambda: (0, 0))],
        out_specs=pl.BlockSpec((1, _LANES), lambda: (0, 0)),
        cost_estimate=ce,
    )(slab)
    return out[0, 0]


def _reference(macro_dr, macro_df, micro_dr, micro_df):
    # Pure-JAX reference (same math, no Pallas) for a sanity check.
    def bce1(x):
        return -jnp.mean(jnp.maximum(jnp.log(x), -100.0))

    def bce0(x):
        return -jnp.mean(jnp.maximum(jnp.log(1.0 - x), -100.0))

    real_l = bce1(macro_dr)
    fake_l = bce0(macro_df)
    real_h = bce1(micro_dr)
    fake_h = bce0(micro_df)
    d_loss = jnp.log(real_l) + jnp.log(1.0 - fake_l)
    d_loss1 = jnp.log(real_h) + jnp.log(1.0 - fake_h)
    return d_loss ** 2 + d_loss1 ** 2


if __name__ == "__main__":
    key = jax.random.PRNGKey(0)
    k1, k2, k3, k4 = jax.random.split(key, 4)

    # Discriminator outputs are probabilities in (0, 1); keep away from the
    # BCE clamp region for a clean numerical comparison.
    macro_dr = jax.random.uniform(k1, (1, 1, 3, 3), jnp.float32, 0.05, 0.95)
    macro_df = jax.random.uniform(k2, (1, 1, 3, 3), jnp.float32, 0.05, 0.95)
    micro_dr = jax.random.uniform(k3, (1, 1, 64, 64), jnp.float32, 0.05, 0.95)
    micro_df = jax.random.uniform(k4, (1, 1, 64, 64), jnp.float32, 0.05, 0.95)

    out = jax.block_until_ready(
        adversarial_own_loss(macro_dr, macro_df, micro_dr, micro_df))

    ref = jax.block_until_ready(
        _reference(macro_dr.astype(jnp.float32), macro_df.astype(jnp.float32),
                   micro_dr.astype(jnp.float32), micro_df.astype(jnp.float32)))

    assert jnp.allclose(out, ref, rtol=1e-5, atol=1e-5), (out, ref)
    print("KERNEL_OK")
</pallas_src>

<mosaic_0001>
module attributes {stable_mosaic.version = 11 : i64} {
  func.func @adversarial_own_loss_kernel(%arg0: memref<72x128xf32, #tpu.memory_space<vmem>>, %arg1: memref<1x128xf32, #tpu.memory_space<vmem>>) attributes {dimension_semantics = [], scalar_prefetch = 0 : i64, scratch_operands = 0 : i64, tpu.core_type = #tpu.core_type<tc>} {
    %c0 = arith.constant 0 : index
    %c0_0 = arith.constant 0 : index
    %0 = vector.load %arg0[%c0, %c0_0] : memref<72x128xf32, #tpu.memory_space<vmem>>, vector<72x128xf32>
    %1 = tpu.iota {dimensions = array<i32: 0>} : vector<72x128xi32>
    %c32_i32 = arith.constant 32 : i32
    %2 = vector.broadcast %c32_i32 : i32 to vector<72x128xi32>
    %3 = arith.cmpi slt, %1, %2 : vector<72x128xi32>
    %c64_i32 = arith.constant 64 : i32
    %4 = vector.broadcast %c64_i32 : i32 to vector<72x128xi32>
    %5 = arith.cmpi eq, %1, %4 : vector<72x128xi32>
    %6 = arith.ori %3, %5 : vector<72x128xi1>
    %c66_i32 = arith.constant 66 : i32
    %7 = vector.broadcast %c66_i32 : i32 to vector<72x128xi32>
    %8 = arith.cmpi sge, %1, %7 : vector<72x128xi32>
    %9 = arith.ori %6, %8 : vector<72x128xi1>
    %10 = math.log %0 : vector<72x128xf32>
    %cst = arith.constant -1.000000e+02 : f32
    %11 = vector.broadcast %cst : f32 to vector<72x128xf32>
    %12 = arith.maximumf %10, %11 : vector<72x128xf32>
    %cst_1 = arith.constant 1.000000e+00 : f32
    %13 = vector.broadcast %cst_1 : f32 to vector<72x128xf32>
    %14 = arith.subf %13, %0 : vector<72x128xf32>
    %15 = math.log %14 : vector<72x128xf32>
    %cst_2 = arith.constant -1.000000e+02 : f32
    %16 = vector.broadcast %cst_2 : f32 to vector<72x128xf32>
    %17 = arith.maximumf %15, %16 : vector<72x128xf32>
    %18 = arith.select %9, %12, %17 : vector<72x128xi1>, vector<72x128xf32>
    %cst_3 = arith.constant dense<0.000000e+00> : vector<72xf32>
    %19 = vector.multi_reduction <add>, %18, %cst_3 [1] : vector<72x128xf32> to vector<72xf32>
    %20 = vector.shape_cast %19 : vector<72xf32> to vector<72x1xf32>
    %21 = vector.extract_strided_slice %1 {offsets = [0, 0], sizes = [72, 1], strides = [1, 1]} : vector<72x128xi32> to vector<72x1xi32>
    %cst_4 = arith.constant 0.000000e+00 : f32
    %22 = vector.broadcast %cst_4 : f32 to vector<72x1xf32>
    %c32_i32_5 = arith.constant 32 : i32
    %23 = vector.broadcast %c32_i32_5 : i32 to vector<72x1xi32>
    %24 = arith.cmpi slt, %21, %23 : vector<72x1xi32>
    %25 = arith.select %24, %20, %22 : vector<72x1xi1>, vector<72x1xf32>
    %cst_6 = arith.constant dense<0.000000e+00> : vector<1xf32>
    %26 = vector.multi_reduction <add>, %25, %cst_6 [0] : vector<72x1xf32> to vector<1xf32>
    %27 = vector.shape_cast %26 : vector<1xf32> to vector<1x1xf32>
    %c32_i32_7 = arith.constant 32 : i32
    %28 = vector.broadcast %c32_i32_7 : i32 to vector<72x1xi32>
    %29 = arith.cmpi sge, %21, %28 : vector<72x1xi32>
    %c64_i32_8 = arith.constant 64 : i32
    %30 = vector.broadcast %c64_i32_8 : i32 to vector<72x1xi32>
    %31 = arith.cmpi slt, %21, %30 : vector<72x1xi32>
    %32 = arith.andi %29, %31 : vector<72x1xi1>
    %33 = arith.select %32, %20, %22 : vector<72x1xi1>, vector<72x1xf32>
    %cst_9 = arith.constant dense<0.000000e+00> : vector<1xf32>
    %34 = vector.multi_reduction <add>, %33, %cst_9 [0] : vector<72x1xf32> to vector<1xf32>
    %35 = vector.shape_cast %34 : vector<1xf32> to vector<1x1xf32>
    %c64_i32_10 = arith.constant 64 : i32
    %36 = vector.broadcast %c64_i32_10 : i32 to vector<72x1xi32>
    %37 = arith.cmpi eq, %21, %36 : vector<72x1xi32>
    %38 = arith.select %37, %20, %22 : vector<72x1xi1>, vector<72x1xf32>
    %cst_11 = arith.constant dense<0.000000e+00> : vector<1xf32>
    %39 = vector.multi_reduction <add>, %38, %cst_11 [0] : vector<72x1xf32> to vector<1xf32>
    %40 = vector.shape_cast %39 : vector<1xf32> to vector<1x1xf32>
    %c65_i32 = arith.constant 65 : i32
    %41 = vector.broadcast %c65_i32 : i32 to vector<72x1xi32>
    %42 = arith.cmpi eq, %21, %41 : vector<72x1xi32>
    %43 = arith.select %42, %20, %22 : vector<72x1xi1>, vector<72x1xf32>
    %cst_12 = arith.constant dense<0.000000e+00> : vector<1xf32>
    %44 = vector.multi_reduction <add>, %43, %cst_12 [0] : vector<72x1xf32> to vector<1xf32>
    %45 = vector.shape_cast %44 : vector<1xf32> to vector<1x1xf32>
    %cst_13 = arith.constant 0.000000e+00 : f32
    %46 = vector.broadcast %cst_13 : f32 to vector<1x1xf32>
    %47 = arith.subf %46, %40 : vector<1x1xf32>
    %cst_14 = arith.constant 9.000000e+00 : f32
    %48 = vector.broadcast %cst_14 : f32 to vector<1x1xf32>
    %49 = arith.divf %47, %48 : vector<1x1xf32>
    %cst_15 = arith.constant 0.000000e+00 : f32
    %50 = vector.broadcast %cst_15 : f32 to vector<1x1xf32>
    %51 = arith.subf %50, %45 : vector<1x1xf32>
    %cst_16 = arith.constant 9.000000e+00 : f32
    %52 = vector.broadcast %cst_16 : f32 to vector<1x1xf32>
    %53 = arith.divf %51, %52 : vector<1x1xf32>
    %cst_17 = arith.constant 0.000000e+00 : f32
    %54 = vector.broadcast %cst_17 : f32 to vector<1x1xf32>
    %55 = arith.subf %54, %27 : vector<1x1xf32>
    %cst_18 = arith.constant 4.096000e+03 : f32
    %56 = vector.broadcast %cst_18 : f32 to vector<1x1xf32>
    %57 = arith.divf %55, %56 : vector<1x1xf32>
    %cst_19 = arith.constant 0.000000e+00 : f32
    %58 = vector.broadcast %cst_19 : f32 to vector<1x1xf32>
    %59 = arith.subf %58, %35 : vector<1x1xf32>
    %cst_20 = arith.constant 4.096000e+03 : f32
    %60 = vector.broadcast %cst_20 : f32 to vector<1x1xf32>
    %61 = arith.divf %59, %60 : vector<1x1xf32>
    %62 = math.log %49 : vector<1x1xf32>
    %cst_21 = arith.constant 1.000000e+00 : f32
    %63 = vector.broadcast %cst_21 : f32 to vector<1x1xf32>
    %64 = arith.subf %63, %53 : vector<1x1xf32>
    %65 = math.log %64 : vector<1x1xf32>
    %66 = arith.addf %62, %65 : vector<1x1xf32>
    %67 = math.log %57 : vector<1x1xf32>
    %cst_22 = arith.constant 1.000000e+00 : f32
    %68 = vector.broadcast %cst_22 : f32 to vector<1x1xf32>
    %69 = arith.subf %68, %61 : vector<1x1xf32>
    %70 = math.log %69 : vector<1x1xf32>
    %71 = arith.addf %67, %70 : vector<1x1xf32>
    %72 = arith.mulf %66, %66 : vector<1x1xf32>
    %73 = arith.mulf %71, %71 : vector<1x1xf32>
    %74 = arith.addf %72, %73 : vector<1x1xf32>
    %75 = vector.shape_cast %74 : vector<1x1xf32> to vector<1x1xf32>
    %76 = vector.broadcast %75 : vector<1x1xf32> to vector<1x128xf32>
    %c0_23 = arith.constant 0 : index
    %c0_24 = arith.constant 0 : index
    %77 = vector.load %arg1[%c0_23, %c0_24] : memref<1x128xf32, #tpu.memory_space<vmem>>, vector<1x128xf32>
    tpu.vector_store %arg1[%c0_23, %c0_24], %76 {strides = array<i32>} : memref<1x128xf32, #tpu.memory_space<vmem>>, vector<1x128xf32>,
    return
  }
}

</mosaic_0001>

<llo_original>
// kernel: tpu_custom_call.1
$region0: #{tpu_custom_call.1}
  #allocation0 [shape = 'u32[]', space=smem, size = 0x4, offset = 0x4, fixed_abs, tag = 'smem constant byte address 0x4 - core index']
  #allocation1 [shape = 'u32[144,128]{1,0:T(1,128)}', space=vmem, size = 0x12000, scoped, tag = 'internal scratch']
  %s0 = inlined_call_operand.hbm [shape: f32[72,128], index: 0, kind: input, shape index: {}]
  %s1 = inlined_call_operand.hbm [shape: f32[1,128], index: 1, kind: output, shape index: {}]
  %s2 = sld [smem:[#allocation0]]
  $region18: #{tpu_custom_call.1} parent=0
    _
  %s4 = ssub.s32 1, %s2
  %s5 = scalar_select 0, %s4, %s2
  $region1: #{tpu_custom_call.1} parent=0
    #allocation2 [shape = 'u8[36864]{0}', space=vmem, size = 0x9000, scoped, tag = 'input window, operand 0, single buffered']
    #allocation3 [shape = 's32[1]{0}', space=sflag, size = 0x4, scoped, tag = 'scoped memory for tpu_custom_call.1']
    #allocation4 [shape = 's32[1]{0}', space=sflag, size = 0x4, scoped, tag = 'scoped memory for tpu_custom_call.1']
    #allocation5 [shape = 'u8[512]{0}', space=vmem, size = 0x400, scoped, tag = 'output window, operand 0, single buffered']
    %6 = vsyncpa [#allocation3], 0
    %7 = vsyncpa [#allocation4], 0
    // Predicated region
    $region2: #{tpu_custom_call.1} parent=1 // pred_check
      _
    $region3: #{tpu_custom_call.1} parent=1 // pred_check_branch
      %9 = sbr.rel (0) target = $region5
    $region4: #{tpu_custom_call.1} parent=1 // pred_region
      %s11 = ssub.s32 1152, 1152
      %12 = vsyncadd [#allocation3], %s11
      %s13 = sshll.u32 [#allocation2], 4
      %s14 = int_to_ptr.vmem [resolvable:$true] %s13
      %19 = dma.hbm_to_vmem [thread:$0]  %s0, 1152, %s14, [#allocation3], 128, 128, 8
    $region5: #{tpu_custom_call.1} parent=1 // pred_fallthru
      _
    // Predicated region
    $region6: #{tpu_custom_call.1} parent=1 // pred_check
      _
    $region7: #{tpu_custom_call.1} parent=1 // pred_check_branch
      %21 = sbr.rel (0) target = $region9
    $region8: #{tpu_custom_call.1} parent=1 // pred_region
      %22 = dma.done [#allocation3], 1152
    $region9: #{tpu_custom_call.1} parent=1 // pred_fallthru
      _
    %v23 = vld [vmem:[#allocation2] sm:$0xff]
    %v24 = vld [vmem:[#allocation2 + $0x8] sm:$0xff]
    %v25 = vld [vmem:[#allocation2 + $0x10] sm:$0xff]
    %v26 = vld [vmem:[#allocation2 + $0x18] sm:$0xff]
    %v27 = vld [vmem:[#allocation2 + $0x20] sm:$0xff]
    %v28 = vld [vmem:[#allocation2 + $0x28] sm:$0xff]
    %v29 = vld [vmem:[#allocation2 + $0x30] sm:$0xff]
    %v30 = vld [vmem:[#allocation2 + $0x38] sm:$0xff]
    %v31 = vld [vmem:[#allocation2 + $0x40] sm:$0xff]
    %v32 = vlaneseq
    %v33 = vshrl.u32 %v32, 7
    %v34 = vadd.s32 %v33, 8
    %v35 = vadd.s32 %v33, 16
    %v36 = vadd.s32 %v33, 24
    %v37 = vadd.s32 %v33, 32
    %v38 = vadd.s32 %v33, 40
    %v39 = vadd.s32 %v33, 48
    %v40 = vadd.s32 %v33, 56
    %v41 = vadd.s32 %v33, 64
    %vm42 = vcmp.lt.s32.totalorder %v33, 32
    %vm43 = vcmp.lt.s32.totalorder %v34, 32
    %vm44 = vcmp.lt.s32.totalorder %v35, 32
    %vm45 = vcmp.lt.s32.totalorder %v36, 32
    %vm46 = vcmp.lt.s32.totalorder %v37, 32
    %vm47 = vcmp.lt.s32.totalorder %v38, 32
    %vm48 = vcmp.lt.s32.totalorder %v39, 32
    %vm49 = vcmp.lt.s32.totalorder %v40, 32
    %vm50 = vcmp.lt.s32.totalorder %v41, 32
    %vm51 = vcmp.eq.s32.totalorder %v33, 64
    %vm52 = vcmp.eq.s32.totalorder %v34, 64
    %vm53 = vcmp.eq.s32.totalorder %v35, 64
    %vm54 = vcmp.eq.s32.totalorder %v36, 64
    %vm55 = vcmp.eq.s32.totalorder %v37, 64
    %vm56 = vcmp.eq.s32.totalorder %v38, 64
    %vm57 = vcmp.eq.s32.totalorder %v39, 64
    %vm58 = vcmp.eq.s32.totalorder %v40, 64
    %vm59 = vcmp.eq.s32.totalorder %v41, 64
    %vm60 = vmor %vm42, %vm51
    %vm61 = vmor %vm43, %vm52
    %vm62 = vmor %vm44, %vm53
    %vm63 = vmor %vm45, %vm54
    %vm64 = vmor %vm46, %vm55
    %vm65 = vmor %vm47, %vm56
    %vm66 = vmor %vm48, %vm57
    %vm67 = vmor %vm49, %vm58
    %vm68 = vmor %vm50, %vm59
    %vm69 = vcmp.ge.s32.totalorder %v33, 66
    %vm70 = vcmp.ge.s32.totalorder %v34, 66
    %vm71 = vcmp.ge.s32.totalorder %v35, 66
    %vm72 = vcmp.ge.s32.totalorder %v36, 66
    %vm73 = vcmp.ge.s32.totalorder %v37, 66
    %vm74 = vcmp.ge.s32.totalorder %v38, 66
    %vm75 = vcmp.ge.s32.totalorder %v39, 66
    %vm76 = vcmp.ge.s32.totalorder %v40, 66
    %vm77 = vcmp.ge.s32.totalorder %v41, 66
    %vm78 = vmor %vm60, %vm69
    %vm79 = vmor %vm61, %vm70
    %vm80 = vmor %vm62, %vm71
    %vm81 = vmor %vm63, %vm72
    %vm82 = vmor %vm64, %vm73
    %vm83 = vmor %vm65, %vm74
    %vm84 = vmor %vm66, %vm75
    %vm85 = vmor %vm67, %vm76
    %vm86 = vmor %vm68, %vm77
    %v87 = vlog2.pop %v23
    %v88 = vmul.f32 %v87, 0.6931472
    %v89 = vlog2.pop %v24
    %v90 = vmul.f32 %v89, 0.6931472
    %v91 = vlog2.pop %v25
    %v92 = vmul.f32 %v91, 0.6931472
    %v93 = vlog2.pop %v26
    %v94 = vmul.f32 %v93, 0.6931472
    %v95 = vlog2.pop %v27
    %v96 = vmul.f32 %v95, 0.6931472
    %v97 = vlog2.pop %v28
    %v98 = vmul.f32 %v97, 0.6931472
    %v99 = vlog2.pop %v29
    %v100 = vmul.f32 %v99, 0.6931472
    %v101 = vlog2.pop %v30
    %v102 = vmul.f32 %v101, 0.6931472
    %v103 = vlog2.pop %v31
    %v104 = vmul.f32 %v103, 0.6931472
    %v105 = vmax.f32 %v88, -100.0
    %v106 = vmax.f32 %v90, -100.0
    %v107 = vmax.f32 %v92, -100.0
    %v108 = vmax.f32 %v94, -100.0
    %v109 = vmax.f32 %v96, -100.0
    %v110 = vmax.f32 %v98, -100.0
    %v111 = vmax.f32 %v100, -100.0
    %v112 = vmax.f32 %v102, -100.0
    %v113 = vmax.f32 %v104, -100.0
    %v114 = vsub.f32 1.0, %v23
    %v115 = vsub.f32 1.0, %v24
    %v116 = vsub.f32 1.0, %v25
    %v117 = vsub.f32 1.0, %v26
    %v118 = vsub.f32 1.0, %v27
    %v119 = vsub.f32 1.0, %v28
    %v120 = vsub.f32 1.0, %v29
    %v121 = vsub.f32 1.0, %v30
    %v122 = vsub.f32 1.0, %v31
    %v123 = vlog2.pop %v114
    %v124 = vmul.f32 %v123, 0.6931472
    %v125 = vlog2.pop %v115
    %v126 = vmul.f32 %v125, 0.6931472
    %v127 = vlog2.pop %v116
    %v128 = vmul.f32 %v127, 0.6931472
    %v129 = vlog2.pop %v117
    %v130 = vmul.f32 %v129, 0.6931472
    %v131 = vlog2.pop %v118
    %v132 = vmul.f32 %v131, 0.6931472
    %v133 = vlog2.pop %v119
    %v134 = vmul.f32 %v133, 0.6931472
    %v135 = vlog2.pop %v120
    %v136 = vmul.f32 %v135, 0.6931472
    %v137 = vlog2.pop %v121
    %v138 = vmul.f32 %v137, 0.6931472
    %v139 = vlog2.pop %v122
    %v140 = vmul.f32 %v139, 0.6931472
    %v141 = vmax.f32 %v124, -100.0
    %v142 = vmax.f32 %v126, -100.0
    %v143 = vmax.f32 %v128, -100.0
    %v144 = vmax.f32 %v130, -100.0
    %v145 = vmax.f32 %v132, -100.0
    %v146 = vmax.f32 %v134, -100.0
    %v147 = vmax.f32 %v136, -100.0
    %v148 = vmax.f32 %v138, -100.0
    %v149 = vmax.f32 %v140, -100.0
    %v150 = vsel %vm78, %v105, %v141
    %v151 = vsel %vm79, %v106, %v142
    %v152 = vsel %vm80, %v107, %v143
    %v153 = vsel %vm81, %v108, %v144
    %v154 = vsel %vm82, %v109, %v145
    %v155 = vsel %vm83, %v110, %v146
    %v156 = vsel %vm84, %v111, %v147
    %v157 = vsel %vm85, %v112, %v148
    %v158 = vsel %vm86, %v113, %v149
    %159 = vadd.xlane.f32.xlu0 %v150
    %v160 = vpop.xlane.xlu0 %159
    %161 = vadd.xlane.f32.xlu0 %v151
    %v162 = vpop.xlane.xlu0 %161
    %163 = vadd.xlane.f32.xlu0 %v152
    %v164 = vpop.xlane.xlu0 %163
    %165 = vadd.xlane.f32.xlu0 %v153
    %v166 = vpop.xlane.xlu0 %165
    %167 = vadd.xlane.f32.xlu0 %v154
    %v168 = vpop.xlane.xlu0 %167
    %169 = vadd.xlane.f32.xlu0 %v155
    %v170 = vpop.xlane.xlu0 %169
    %171 = vadd.xlane.f32.xlu0 %v156
    %v172 = vpop.xlane.xlu0 %171
    %173 = vadd.xlane.f32.xlu0 %v157
    %v174 = vpop.xlane.xlu0 %173
    %175 = vadd.xlane.f32.xlu0 %v158
    %v176 = vpop.xlane.xlu0 %175
    %v177 = vsel %vm42, %v160, 0.0
    %v178 = vsel %vm43, %v162, 0.0
    %v179 = vsel %vm44, %v164, 0.0
    %v180 = vsel %vm45, %v166, 0.0
    %v181 = vsel %vm46, %v168, 0.0
    %v182 = vsel %vm47, %v170, 0.0
    %v183 = vsel %vm48, %v172, 0.0
    %v184 = vsel %vm49, %v174, 0.0
    %v185 = vsel %vm50, %v176, 0.0
    %v186 = vadd.f32 %v177, %v178
    %v187 = vadd.f32 %v186, %v179
    %v188 = vadd.f32 %v187, %v180
    %v189 = vadd.f32 %v188, %v181
    %v190 = vadd.f32 %v189, %v182
    %v191 = vadd.f32 %v190, %v183
    %v192 = vadd.f32 %v191, %v184
    %v193 = vadd.f32 %v192, %v185
    %v194 = vrot.slane %v193, 4
    %v195 = vadd.f32 %v193, %v194
    %v196 = vrot.slane %v195, 2
    %v197 = vadd.f32 %v195, %v196
    %v198 = vrot.slane %v197, 1
    %v199 = vadd.f32 %v197, %v198
    %vm200 = vcmp.ge.s32.totalorder %v33, 32
    %vm201 = vcmp.ge.s32.totalorder %v34, 32
    %vm202 = vcmp.ge.s32.totalorder %v35, 32
    %vm203 = vcmp.ge.s32.totalorder %v36, 32
    %vm204 = vcmp.ge.s32.totalorder %v37, 32
    %vm205 = vcmp.ge.s32.totalorder %v38, 32
    %vm206 = vcmp.ge.s32.totalorder %v39, 32
    %vm207 = vcmp.ge.s32.totalorder %v40, 32
    %vm208 = vcmp.ge.s32.totalorder %v41, 32
    %vm209 = vcmp.lt.s32.totalorder %v33, 64
    %vm210 = vcmp.lt.s32.totalorder %v34, 64
    %vm211 = vcmp.lt.s32.totalorder %v35, 64
    %vm212 = vcmp.lt.s32.totalorder %v36, 64
    %vm213 = vcmp.lt.s32.totalorder %v37, 64
    %vm214 = vcmp.lt.s32.totalorder %v38, 64
    %vm215 = vcmp.lt.s32.totalorder %v39, 64
    %vm216 = vcmp.lt.s32.totalorder %v40, 64
    %vm217 = vcmp.lt.s32.totalorder %v41, 64
    %vm218 = vmand %vm200, %vm209
    %vm219 = vmand %vm201, %vm210
    %vm220 = vmand %vm202, %vm211
    %vm221 = vmand %vm203, %vm212
    %vm222 = vmand %vm204, %vm213
    %vm223 = vmand %vm205, %vm214
    %vm224 = vmand %vm206, %vm215
    %vm225 = vmand %vm207, %vm216
    %vm226 = vmand %vm208, %vm217
    %v227 = vsel %vm218, %v160, 0.0
    %v228 = vsel %vm219, %v162, 0.0
    %v229 = vsel %vm220, %v164, 0.0
    %v230 = vsel %vm221, %v166, 0.0
    %v231 = vsel %vm222, %v168, 0.0
    %v232 = vsel %vm223, %v170, 0.0
    %v233 = vsel %vm224, %v172, 0.0
    %v234 = vsel %vm225, %v174, 0.0
    %v235 = vsel %vm226, %v176, 0.0
    %v236 = vadd.f32 %v227, %v228
    %v237 = vadd.f32 %v236, %v229
    %v238 = vadd.f32 %v237, %v230
    %v239 = vadd.f32 %v238, %v231
    %v240 = vadd.f32 %v239, %v232
    %v241 = vadd.f32 %v240, %v233
    %v242 = vadd.f32 %v241, %v234
    %v243 = vadd.f32 %v242, %v235
    %v244 = vrot.slane %v243, 4
    %v245 = vadd.f32 %v243, %v244
    %v246 = vrot.slane %v245, 2
    %v247 = vadd.f32 %v245, %v246
    %v248 = vrot.slane %v247, 1
    %v249 = vadd.f32 %v247, %v248
    %v250 = vsel %vm51, %v160, 0.0
    %v251 = vsel %vm52, %v162, 0.0
    %v252 = vsel %vm53, %v164, 0.0
    %v253 = vsel %vm54, %v166, 0.0
    %v254 = vsel %vm55, %v168, 0.0
    %v255 = vsel %vm56, %v170, 0.0
    %v256 = vsel %vm57, %v172, 0.0
    %v257 = vsel %vm58, %v174, 0.0
    %v258 = vsel %vm59, %v176, 0.0
    %v259 = vadd.f32 %v250, %v251
    %v260 = vadd.f32 %v259, %v252
    %v261 = vadd.f32 %v260, %v253
    %v262 = vadd.f32 %v261, %v254
    %v263 = vadd.f32 %v262, %v255
    %v264 = vadd.f32 %v263, %v256
    %v265 = vadd.f32 %v264, %v257
    %v266 = vadd.f32 %v265, %v258
    %v267 = vrot.slane %v266, 4
    %v268 = vadd.f32 %v266, %v267
    %v269 = vrot.slane %v268, 2
    %v270 = vadd.f32 %v268, %v269
    %v271 = vrot.slane %v270, 1
    %v272 = vadd.f32 %v270, %v271
    %vm273 = vcmp.eq.s32.totalorder %v33, 65
    %vm274 = vcmp.eq.s32.totalorder %v34, 65
    %vm275 = vcmp.eq.s32.totalorder %v35, 65
    %vm276 = vcmp.eq.s32.totalorder %v36, 65
    %vm277 = vcmp.eq.s32.totalorder %v37, 65
    %vm278 = vcmp.eq.s32.totalorder %v38, 65
    %vm279 = vcmp.eq.s32.totalorder %v39, 65
    %vm280 = vcmp.eq.s32.totalorder %v40, 65
    %vm281 = vcmp.eq.s32.totalorder %v41, 65
    %v282 = vsel %vm273, %v160, 0.0
    %v283 = vsel %vm274, %v162, 0.0
    %v284 = vsel %vm275, %v164, 0.0
    %v285 = vsel %vm276, %v166, 0.0
    %v286 = vsel %vm277, %v168, 0.0
    %v287 = vsel %vm278, %v170, 0.0
    %v288 = vsel %vm279, %v172, 0.0
    %v289 = vsel %vm280, %v174, 0.0
    %v290 = vsel %vm281, %v176, 0.0
    %v291 = vadd.f32 %v282, %v283
    %v292 = vadd.f32 %v291, %v284
    %v293 = vadd.f32 %v292, %v285
    %v294 = vadd.f32 %v293, %v286
    %v295 = vadd.f32 %v294, %v287
    %v296 = vadd.f32 %v295, %v288
    %v297 = vadd.f32 %v296, %v289
    %v298 = vadd.f32 %v297, %v290
    %v299 = vrot.slane %v298, 4
    %v300 = vadd.f32 %v298, %v299
    %v301 = vrot.slane %v300, 2
    %v302 = vadd.f32 %v300, %v301
    %v303 = vrot.slane %v302, 1
    %v304 = vadd.f32 %v302, %v303
    %v305 = vsub.f32 0.0, %v272
    %v306 = vrcp.pop 9.0
    %v307 = vmul.f32 %v305, %v306
    %v308 = vsub.f32 0.0, %v304
    %v309 = vmul.f32 %v308, %v306
    %v310 = vsub.f32 0.0, %v199
    %v311 = vrcp.pop 4096.0
    %v312 = vmul.f32 %v310, %v311
    %v313 = vsub.f32 0.0, %v249
    %v314 = vmul.f32 %v313, %v311
    %v315 = vlog2.pop %v307
    %v316 = vmul.f32 %v315, 0.6931472
    %v317 = vsub.f32 1.0, %v309
    %v318 = vlog2.pop %v317
    %v319 = vmul.f32 %v318, 0.6931472
    %v320 = vadd.f32 %v316, %v319
    %v321 = vlog2.pop %v312
    %v322 = vmul.f32 %v321, 0.6931472
    %v323 = vsub.f32 1.0, %v314
    %v324 = vlog2.pop %v323
    %v325 = vmul.f32 %v324, 0.6931472
    %v326 = vadd.f32 %v322, %v325
    %v327 = vmul.f32 %v320, %v320
    %v328 = vmul.f32 %v326, %v326
    %v329 = vadd.f32 %v327, %v328
    %330 = vst [vmem:[#allocation5] sm:$0x1] %v329
    // Predicated region
    $region10: #{tpu_custom_call.1} parent=1 // pred_check
      _
    $region11: #{tpu_custom_call.1} parent=1 // pred_check_branch
      %332 = sbr.rel (0) target = $region13
    $region12: #{tpu_custom_call.1} parent=1 // pred_region
      %s334 = ssub.s32 16, 16
      %335 = vsyncadd [#allocation4], %s334
      %s337 = sshll.u32 [#allocation5], 4
      %s338 = int_to_ptr.vmem [resolvable:$true] %s337
      %340 = dma.vmem_to_hbm [thread:$0]  %s338, 16, %s1, [#allocation4]
    $region13: #{tpu_custom_call.1} parent=1 // pred_fallthru
      _
    // Predicated region
    $region14: #{tpu_custom_call.1} parent=1 // pred_check
      _
    $region15: #{tpu_custom_call.1} parent=1 // pred_check_branch
      %342 = sbr.rel (0) target = $region17
    $region16: #{tpu_custom_call.1} parent=1 // pred_region
      %343 = dma.done [#allocation4], 16
    $region17: #{tpu_custom_call.1} parent=1 // pred_fallthru
      _
    %344 = vsyncpa [#allocation3], 1
    %345 = vsyncpa [#allocation4], 1

</llo_original>
